<compile_context>
chip_gen: v6e
topology: v6e:2x2x1
jax: 0.10.0
libtpu: 0.0.40
codegen_flags: <defaults>
</compile_context>

<pallas_src>
import functools

import jax
import jax.numpy as jnp
from jax import lax
from jax.experimental import pallas as pl
from jax.experimental.pallas import tpu as pltpu

EPS = 1e-5
LANES = 128


def _round_up(x, m):
    return (x + m - 1) // m * m


def _sublane_mult(dtype):
    return {4: 8, 2: 16, 1: 32}[jnp.dtype(dtype).itemsize]


def _pick_tile_s(S, target):
    """Largest divisor of S that is a multiple of 128 and <= target, else S."""
    cands = [d for d in range(LANES, min(S, target) + 1, LANES) if S % d == 0]
    return max(cands) if cands else S


def _vmem_capacity_bytes():
    try:
        info = pltpu.get_tpu_info()
        cap = getattr(info, "vmem_capacity_bytes", None)
        if cap:
            return int(cap)
    except Exception:
        pass
    return 64 * 1024 * 1024   # conservative default (v7x per-TC VMEM)


def _stats_kernel(xp_ref, w_ref, stat_ref):
    # Single MXU matmul per tile: [cout_p, K_p] @ [K_p, tile_s] -> f32 [cout_p, tile_s].
    y = jnp.dot(w_ref[...], xp_ref[...], preferred_element_type=jnp.float32)
    # Merged, sublane-aligned per-tile stats block: [:, 0]=sum, [:, 1]=sum of squares.
    stat_ref[:, 0:1] = jnp.sum(y, axis=1, keepdims=True)
    stat_ref[:, 1:2] = jnp.sum(y * y, axis=1, keepdims=True)


def _apply_kernel(xp_ref, w_ref, ss_ref, o_ref):
    y = jnp.dot(w_ref[...], xp_ref[...], preferred_element_type=jnp.float32)
    # Fused BN affine; output is lane-dense [cout_p, tile_s] (NCHW-flat).
    o_ref[...] = (y * ss_ref[:, 0:1] + ss_ref[:, 1:2]).astype(o_ref.dtype)


def reset_layer_forward(x_nchw, conv_w, conv_b, bn_gamma, bn_beta, *,
                        pad=1, compute_dtype=jnp.float32, tile_spatial=2048):
    """x_nchw: [N, Cin, H, W]; conv_w: [Cout, Cin, kh, kw] (PyTorch layout)."""
    N, Cin, H, W = x_nchw.shape
    Cout, Cin2, kh, kw = conv_w.shape
    assert Cin2 == Cin
    assert kh == kw and kh % 2 == 1 and pad == (kh - 1) // 2, \
        "kernel covers stride-1 'same' odd-size convolutions"

    S = H * W
    M = N * S
    K = kh * kw * Cin
    K_p = _round_up(K, 8)
    cout_p = _round_up(Cout, 8)
    tile_s = _pick_tile_s(S, tile_spatial)
    n_t = S // tile_s

    # ---- XLA glue: im2col straight from NCHW (single pad, no transpose).
    # Patch layout [N, K_p, H*W]: (tap, cin) on sublanes, spatial on lanes.
    xpad = jnp.pad(x_nchw, ((0, 0), (0, 0), (pad, pad), (pad, pad)))
    taps = [xpad[:, :, di:di + H, dj:dj + W]
            for di in range(kh) for dj in range(kw)]              # kh*kw x [N,Cin,H,W]
    patch = jnp.stack(taps, axis=1).reshape(N, K, S)              # [N, K, H*W]
    patch = jnp.pad(patch, ((0, 0), (0, K_p - K), (0, 0))).astype(compute_dtype)

    # Weights [cout_p, K_p], flattened with the same (tap, cin) order.
    w2 = jnp.transpose(conv_w, (0, 2, 3, 1)).reshape(Cout, K)
    w2 = jnp.pad(w2, ((0, cout_p - Cout), (0, K_p - K))).astype(compute_dtype)

    grid = (N, n_t)
    xp_spec = pl.BlockSpec((None, K_p, tile_s), lambda n, t: (n, 0, t))
    w_spec = pl.BlockSpec((cout_p, K_p), lambda n, t: (0, 0))
    stat_spec = pl.BlockSpec((None, None, cout_p, 2), lambda n, t: (n, t, 0, 0))
    ss_spec = pl.BlockSpec((cout_p, 2), lambda n, t: (0, 0))
    out_spec = pl.BlockSpec((None, cout_p, tile_s), lambda n, t: (n, 0, t))

    # ---- VMEM estimate with explicit lane/sublane padding; generation-aware cap.
    isz = jnp.dtype(compute_dtype).itemsize
    sm = _sublane_mult(compute_dtype)
    lane_s = _round_up(tile_s, LANES)
    est = (2 * _round_up(K_p, sm) * lane_s * isz                      # patch dbl buffer
           + 2 * _round_up(cout_p, sm) * _round_up(K_p, LANES) * isz  # weights dbl buffer
           + 2 * _round_up(cout_p, 8) * lane_s * 4                    # out dbl buffer
           + 4 * _round_up(cout_p, 8) * LANES * 4                     # ss + stats blocks
           + 4 * _round_up(cout_p, 8) * lane_s * 4)                   # live y / temporaries
    cap = _vmem_capacity_bytes()
    vmem_limit = int(min(max(2 * est, 32 * 1024 * 1024), int(cap * 0.7)))
    # x is tiled per (n, t), so no whole-image DMA duplication across TCs:
    # both grid axes are safe to shard.
    cparams = pltpu.CompilerParams(
        dimension_semantics=("parallel", "parallel"),
        vmem_limit_bytes=vmem_limit)

    # ---- pass 1: conv (one matmul/tile) + per-tile per-channel [sum, sum_sq] ----
    stats = pl.pallas_call(
        _stats_kernel,
        grid=grid,
        in_specs=[xp_spec, w_spec],
        out_specs=stat_spec,
        out_shape=jax.ShapeDtypeStruct((N, n_t, cout_p, 2), jnp.float32),
        compiler_params=cparams,
    )(patch, w2)

    # ---- global batch statistics + fused BN affine (tiny XLA reduction) ----
    # Note: E[y^2] - E[y]^2 in f32 can cancel when |mean| >> std; partial-sum tree
    # mitigates but does not eliminate this.
    s = jnp.sum(stats, axis=(0, 1))                        # [cout_p, 2]
    mean = s[:, 0] / M
    var = jnp.maximum(s[:, 1] / M - mean * mean, 0.0)      # biased var (BN training mode)
    gamma_p = jnp.pad(bn_gamma.astype(jnp.float32), (0, cout_p - Cout))
    beta_p = jnp.pad(bn_beta.astype(jnp.float32), (0, cout_p - Cout))
    scale = gamma_p * lax.rsqrt(var + EPS)
    # conv_b cancels exactly in train-mode BN: (y+b) - mean(y+b) == y - mean(y),
    # so it is folded away (kept in the signature for API fidelity).
    shift = beta_p - mean * scale
    ss = jnp.stack([scale, shift], axis=1)                 # [cout_p, 2]

    # ---- pass 2: recompute conv (cheap, small Cin) and apply y*scale + shift ----
    out_flat = pl.pallas_call(
        _apply_kernel,
        grid=grid,
        in_specs=[xp_spec, w_spec, ss_spec],
        out_specs=out_spec,
        out_shape=jax.ShapeDtypeStruct((N, cout_p, S), jnp.float32),
        compiler_params=cparams,
    )(patch, w2, ss)

    out = out_flat.reshape(N, cout_p, H, W)                # already NCHW
    if cout_p != Cout:
        out = out[:, :Cout]
    return out


def _reference_forward(x_nchw, conv_w, conv_b, bn_gamma, bn_beta, *, pad=1):
    """Pure-JAX reference (PyTorch Conv2d + training-mode BatchNorm2d)."""
    y = lax.conv_general_dilated(
        x_nchw, conv_w, window_strides=(1, 1),
        padding=((pad, pad), (pad, pad)),
        dimension_numbers=("NCHW", "OIHW", "NCHW"),
    ) + conv_b[None, :, None, None]
    mean = jnp.mean(y, axis=(0, 2, 3), keepdims=True)
    var = jnp.mean((y - mean) ** 2, axis=(0, 2, 3), keepdims=True)
    y_hat = (y - mean) * lax.rsqrt(var + EPS)
    return y_hat * bn_gamma[None, :, None, None] + bn_beta[None, :, None, None]


if __name__ == "__main__":
    key = jax.random.PRNGKey(0)
    k_x, k_w, k_b, k_g, k_be = jax.random.split(key, 5)

    # Test 1: module-sized shapes (single spatial tile per image).
    N, Cin, H, W = 2, 4, 16, 16
    Cout, kh, kw = 8, 3, 3
    x = jax.random.normal(k_x, (N, Cin, H, W), dtype=jnp.float32)
    conv_w = 0.1 * jax.random.normal(k_w, (Cout, Cin, kh, kw), dtype=jnp.float32)
    conv_b = 0.1 * jax.random.normal(k_b, (Cout,), dtype=jnp.float32)
    # Deterministic "goal" stats as set by ResetLayer.set_stats(goal_mean, goal_std).
    bn_gamma = 1.0 + 0.1 * jax.random.normal(k_g, (Cout,), dtype=jnp.float32)  # goal_std
    bn_beta = 0.1 * jax.random.normal(k_be, (Cout,), dtype=jnp.float32)        # goal_mean

    fwd = jax.jit(functools.partial(reset_layer_forward, pad=1))
    out = jax.block_until_ready(fwd(x, conv_w, conv_b, bn_gamma, bn_beta))
    ref = _reference_forward(x, conv_w, conv_b, bn_gamma, bn_beta, pad=1)
    assert out.shape == (N, Cout, H, W)
    err = float(jnp.max(jnp.abs(out - ref)))
    assert jnp.allclose(out, ref, atol=1e-4, rtol=1e-4), err

    # Test 2: multiple spatial tiles per image (exercises the grid / tile indexing).
    N2, C2, H2, W2, Co2 = 2, 3, 32, 32, 16
    x2 = jax.random.normal(k_x, (N2, C2, H2, W2), dtype=jnp.float32)
    w2 = 0.1 * jax.random.normal(k_w, (Co2, C2, 3, 3), dtype=jnp.float32)
    b2 = 0.1 * jax.random.normal(k_b, (Co2,), dtype=jnp.float32)
    g2 = 1.0 + 0.1 * jax.random.normal(k_g, (Co2,), dtype=jnp.float32)
    be2 = 0.1 * jax.random.normal(k_be, (Co2,), dtype=jnp.float32)
    fwd2 = jax.jit(functools.partial(reset_layer_forward, pad=1, tile_spatial=256))
    out2 = jax.block_until_ready(fwd2(x2, w2, b2, g2, be2))
    ref2 = _reference_forward(x2, w2, b2, g2, be2, pad=1)
    err2 = float(jnp.max(jnp.abs(out2 - ref2)))
    assert jnp.allclose(out2, ref2, atol=1e-4, rtol=1e-4), err2

    # Test 3: Cout not a multiple of 8 (exercises channel padding + final slice).
    N3, C3, H3, W3, Co3 = 2, 3, 16, 16, 5
    x3 = jax.random.normal(k_x, (N3, C3, H3, W3), dtype=jnp.float32)
    w3 = 0.1 * jax.random.normal(k_w, (Co3, C3, 3, 3), dtype=jnp.float32)
    b3 = 0.1 * jax.random.normal(k_b, (Co3,), dtype=jnp.float32)
    g3 = 1.0 + 0.1 * jax.random.normal(k_g, (Co3,), dtype=jnp.float32)
    be3 = 0.1 * jax.random.normal(k_be, (Co3,), dtype=jnp.float32)
    out3 = jax.block_until_ready(jax.jit(functools.partial(reset_layer_forward, pad=1))(
        x3, w3, b3, g3, be3))
    ref3 = _reference_forward(x3, w3, b3, g3, be3, pad=1)
    err3 = float(jnp.max(jnp.abs(out3 - ref3)))
    assert out3.shape == (N3, Co3, H3, W3)
    assert jnp.allclose(out3, ref3, atol=1e-4, rtol=1e-4), err3

    # bf16 matmul inputs (v6e/v7x fast path); f32 accumulation + f32 BN math.
    fwd_bf16 = jax.jit(functools.partial(reset_layer_forward, pad=1,
                                         compute_dtype=jnp.bfloat16))
    out_bf = jax.block_until_ready(fwd_bf16(x, conv_w, conv_b, bn_gamma, bn_beta))
    err_bf = float(jnp.max(jnp.abs(out_bf - ref)))
    assert jnp.allclose(out_bf, ref, atol=7e-2, rtol=7e-2), err_bf

    print("KERNEL_OK")
</pallas_src>

<mosaic_0001>
module attributes {stable_mosaic.version = 11 : i64} {
  func.func @_stats_kernel(%arg0: i32, %arg1: i32, %arg2: memref<1x40x256xf32, #tpu.memory_space<vmem>>, %arg3: memref<8x40xf32, #tpu.memory_space<vmem>>, %arg4: memref<1x1x8x2xf32, #tpu.memory_space<vmem>>) attributes {dimension_semantics = [#tpu.dimension_semantics<parallel>, #tpu.dimension_semantics<parallel>], iteration_bounds = array<i64: 2, 1>, scalar_prefetch = 0 : i64, scratch_operands = 0 : i64, tpu.core_type = #tpu.core_type<tc>, window_params = [{transform_indices = @transform_0, window_bounds = array<i64: 1, 40, 256>}, {pipeline_mode = #tpu.pipeline_mode<synchronous>, transform_indices = @transform_1, window_bounds = array<i64: 8, 40>}, {transform_indices = @transform_2, window_bounds = array<i64: 1, 1, 8, 2>}]} {
    %c0 = arith.constant 0 : index
    %c0_0 = arith.constant 0 : index
    %0 = vector.load %arg3[%c0, %c0_0] : memref<8x40xf32, #tpu.memory_space<vmem>>, vector<8x40xf32>
    %c0_1 = arith.constant 0 : index
    %c0_2 = arith.constant 0 : index
    %c0_3 = arith.constant 0 : index
    %1 = vector.load %arg2[%c0_1, %c0_2, %c0_3] : memref<1x40x256xf32, #tpu.memory_space<vmem>>, vector<1x40x256xf32>
    %2 = vector.shape_cast %1 : vector<1x40x256xf32> to vector<40x256xf32>
    %cst = arith.constant dense<0.000000e+00> : vector<8x256xf32>
    %3 = tpu.matmul %0, %2, %cst {dimension_numbers = #tpu.dot_dimension_numbers<[1], [0], [0], [1], [0, 0, 1, 1], [], []>} : vector<8x40xf32>, vector<40x256xf32>, vector<8x256xf32> -> vector<8x256xf32>
    %cst_4 = arith.constant dense<0.000000e+00> : vector<8xf32>
    %4 = vector.multi_reduction <add>, %3, %cst_4 [1] : vector<8x256xf32> to vector<8xf32>
    %5 = vector.shape_cast %4 : vector<8xf32> to vector<8x1xf32>
    %c0_5 = arith.constant 0 : index
    %c0_6 = arith.constant 0 : index
    %c0_7 = arith.constant 0 : index
    %c0_8 = arith.constant 0 : index
    %6 = vector.load %arg4[%c0_5, %c0_6, %c0_7, %c0_8] : memref<1x1x8x2xf32, #tpu.memory_space<vmem>>, vector<1x1x8x1xf32>
    %7 = vector.shape_cast %6 : vector<1x1x8x1xf32> to vector<8x1xf32>
    %8 = vector.shape_cast %5 : vector<8x1xf32> to vector<1x1x8x1xf32>
    tpu.vector_store %arg4[%c0_5, %c0_6, %c0_7, %c0_8], %8 {strides = array<i32>} : memref<1x1x8x2xf32, #tpu.memory_space<vmem>>, vector<1x1x8x1xf32>,
    %9 = arith.mulf %3, %3 : vector<8x256xf32>
    %cst_9 = arith.constant dense<0.000000e+00> : vector<8xf32>
    %10 = vector.multi_reduction <add>, %9, %cst_9 [1] : vector<8x256xf32> to vector<8xf32>
    %11 = vector.shape_cast %10 : vector<8xf32> to vector<8x1xf32>
    %c0_10 = arith.constant 0 : index
    %c0_11 = arith.constant 0 : index
    %c0_12 = arith.constant 0 : index
    %c1 = arith.constant 1 : index
    %12 = vector.load %arg4[%c0_10, %c0_11, %c0_12, %c1] : memref<1x1x8x2xf32, #tpu.memory_space<vmem>>, vector<1x1x8x1xf32>
    %13 = vector.shape_cast %12 : vector<1x1x8x1xf32> to vector<8x1xf32>
    %14 = vector.shape_cast %11 : vector<8x1xf32> to vector<1x1x8x1xf32>
    tpu.vector_store %arg4[%c0_10, %c0_11, %c0_12, %c1], %14 {strides = array<i32>} : memref<1x1x8x2xf32, #tpu.memory_space<vmem>>, vector<1x1x8x1xf32>,
    return
  }
  func.func @transform_0(%arg0: i32, %arg1: i32) -> (i32, i32, i32) {
    %c0_i32 = arith.constant 0 : i32
    %c0_i32_0 = arith.constant 0 : i32
    return %arg0, %c0_i32, %arg1 : i32, i32, i32
  }
  func.func @transform_1(%arg0: i32, %arg1: i32) -> (i32, i32) {
    %c0_i32 = arith.constant 0 : i32
    %c0_i32_0 = arith.constant 0 : i32
    %c0_i32_1 = arith.constant 0 : i32
    return %c0_i32, %c0_i32_0 : i32, i32
  }
  func.func @transform_2(%arg0: i32, %arg1: i32) -> (i32, i32, i32, i32) {
    %c0_i32 = arith.constant 0 : i32
    %c0_i32_0 = arith.constant 0 : i32
    %c0_i32_1 = arith.constant 0 : i32
    return %arg0, %arg1, %c0_i32, %c0_i32_0 : i32, i32, i32, i32
  }
}

module attributes {stable_mosaic.version = 11 : i64} {
  func.func @_apply_kernel(%arg0: i32, %arg1: i32, %arg2: memref<1x40x256xf32, #tpu.memory_space<vmem>>, %arg3: memref<8x40xf32, #tpu.memory_space<vmem>>, %arg4: memref<8x2xf32, #tpu.memory_space<vmem>>, %arg5: memref<1x8x256xf32, #tpu.memory_space<vmem>>) attributes {dimension_semantics = [#tpu.dimension_semantics<parallel>, #tpu.dimension_semantics<parallel>], iteration_bounds = array<i64: 2, 1>, scalar_prefetch = 0 : i64, scratch_operands = 0 : i64, tpu.core_type = #tpu.core_type<tc>, window_params = [{transform_indices = @transform_0, window_bounds = array<i64: 1, 40, 256>}, {pipeline_mode = #tpu.pipeline_mode<synchronous>, transform_indices = @transform_1, window_bounds = array<i64: 8, 40>}, {pipeline_mode = #tpu.pipeline_mode<synchronous>, transform_indices = @transform_2, window_bounds = array<i64: 8, 2>}, {transform_indices = @transform_3, window_bounds = array<i64: 1, 8, 256>}]} {
    %c0 = arith.constant 0 : index
    %c0_0 = arith.constant 0 : index
    %0 = vector.load %arg3[%c0, %c0_0] : memref<8x40xf32, #tpu.memory_space<vmem>>, vector<8x40xf32>
    %c0_1 = arith.constant 0 : index
    %c0_2 = arith.constant 0 : index
    %c0_3 = arith.constant 0 : index
    %1 = vector.load %arg2[%c0_1, %c0_2, %c0_3] : memref<1x40x256xf32, #tpu.memory_space<vmem>>, vector<1x40x256xf32>
    %2 = vector.shape_cast %1 : vector<1x40x256xf32> to vector<40x256xf32>
    %cst = arith.constant dense<0.000000e+00> : vector<8x256xf32>
    %3 = tpu.matmul %0, %2, %cst {dimension_numbers = #tpu.dot_dimension_numbers<[1], [0], [0], [1], [0, 0, 1, 1], [], []>} : vector<8x40xf32>, vector<40x256xf32>, vector<8x256xf32> -> vector<8x256xf32>
    %c0_4 = arith.constant 0 : index
    %c0_5 = arith.constant 0 : index
    %4 = vector.load %arg4[%c0_4, %c0_5] : memref<8x2xf32, #tpu.memory_space<vmem>>, vector<8x1xf32>
    %5 = vector.broadcast %4 : vector<8x1xf32> to vector<8x256xf32>
    %6 = arith.mulf %3, %5 : vector<8x256xf32>
    %c0_6 = arith.constant 0 : index
    %c1 = arith.constant 1 : index
    %7 = vector.load %arg4[%c0_6, %c1] : memref<8x2xf32, #tpu.memory_space<vmem>>, vector<8x1xf32>
    %8 = vector.broadcast %7 : vector<8x1xf32> to vector<8x256xf32>
    %9 = arith.addf %6, %8 : vector<8x256xf32>
    %c0_7 = arith.constant 0 : index
    %c0_8 = arith.constant 0 : index
    %c0_9 = arith.constant 0 : index
    %10 = vector.load %arg5[%c0_7, %c0_8, %c0_9] : memref<1x8x256xf32, #tpu.memory_space<vmem>>, vector<1x8x256xf32>
    %11 = vector.shape_cast %10 : vector<1x8x256xf32> to vector<8x256xf32>
    %12 = vector.shape_cast %9 : vector<8x256xf32> to vector<1x8x256xf32>
    tpu.vector_store %arg5[%c0_7, %c0_8, %c0_9], %12 {strides = array<i32>} : memref<1x8x256xf32, #tpu.memory_space<vmem>>, vector<1x8x256xf32>,
    return
  }
  func.func @transform_0(%arg0: i32, %arg1: i32) -> (i32, i32, i32) {
    %c0_i32 = arith.constant 0 : i32
    %c0_i32_0 = arith.constant 0 : i32
    return %arg0, %c0_i32, %arg1 : i32, i32, i32
  }
  func.func @transform_1(%arg0: i32, %arg1: i32) -> (i32, i32) {
    %c0_i32 = arith.constant 0 : i32
    %c0_i32_0 = arith.constant 0 : i32
    %c0_i32_1 = arith.constant 0 : i32
    return %c0_i32, %c0_i32_0 : i32, i32
  }
  func.func @transform_2(%arg0: i32, %arg1: i32) -> (i32, i32) {
    %c0_i32 = arith.constant 0 : i32
    %c0_i32_0 = arith.constant 0 : i32
    %c0_i32_1 = arith.constant 0 : i32
    return %c0_i32, %c0_i32_0 : i32, i32
  }
  func.func @transform_3(%arg0: i32, %arg1: i32) -> (i32, i32, i32) {
    %c0_i32 = arith.constant 0 : i32
    %c0_i32_0 = arith.constant 0 : i32
    return %arg0, %c0_i32, %arg1 : i32, i32, i32
  }
}

</mosaic_0001>

<llo_original>
// kernel: reset_layer_forward.2
$region0: #{reset_layer_forward.2}
  #allocation0 [shape = 'u32[]', space=smem, size = 0x4, offset = 0x4, fixed_abs, tag = 'smem constant byte address 0x4 - core index']
  #allocation1 [shape = 'u32[144,128]{1,0:T(1,128)}', space=vmem, size = 0x12000, scoped, tag = 'internal scratch']
  %s0 = inlined_call_operand.vmem [shape: f32[2,40,256], index: 0, kind: input, shape index: {}]
  %s1 = inlined_call_operand.vmem [shape: f32[8,40], index: 1, kind: input, shape index: {}]
  %s2 = inlined_call_operand.vmem [shape: f32[2,1,8,2], index: 2, kind: output, shape index: {}]
  %s3 = sld [smem:[#allocation0]]
  $region41: #{reset_layer_forward.2} parent=0
    _
  %s5 = ssub.s32 1, %s3
  %s6 = scalar_select 0, %s5, %s3
  loop: start=0, step=1, limit=4
  $region2: #{reset_layer_forward.2} parent=0 // loop_pre_header
    _
  $region3: #{reset_layer_forward.2} parent=0 // loop_header
    %s8 = sphi 0, %s12
    %p9 = scmp.ge.s32.totalorder %s8, 4
    %s15 = sphi 0, %s27
    %s16 = sphi 0, %s23
    %s17 = sphi 0, %s15
    %s18 = sphi 0, %s16
    %s19 = sphi 0, %s17
    %s20 = sphi 0, %s18
    %s32 = sphi 0, %s34
    %s35 = sphi 0, %s32
    %s36 = sphi 0, %s35
    %s52 = sphi 0, %s36
    %s56 = sphi 0, %s56
    %s58 = sphi 0, %s56
    %s59 = sphi 0, %s58
    %s73 = sphi 0, %s59
    %s81 = sphi 0, %s83
    %s84 = sphi 0, %s81
    %s85 = sphi 0, %s84
    %s101 = sphi 0, %s85
  $region4: #{reset_layer_forward.2} parent=0 // loop_header_branch
    %11 = sbr.rel (%p9) target = $region8
  $region5: #{reset_layer_forward.2} parent=0 // loop_body
    %s13 = ssub.s32 %s8, 1
    %s14 = ssub.s32 %s8, 2
    %s21 = sadd.s32 1, %s16
    %p22 = scmp.ge.s32.totalorder %s21, 1
    %s23 = scalar_select %p22, 0, %s21
    %s24 = sadd.s32 1, %s15
    %s25 = scalar_select %p22, %s24, %s15
    %p26 = scmp.ge.s32.totalorder %s25, 2
    %s27 = scalar_select %p26, 0, %s25
    %s28 = ssub.s32 %s15, %s27
    %s29 = ssub.s32 %s16, %s23
    %s30 = sor.u32 %s28, %s29
    %p31 = scmp.eq.s32.totalorder %s30, 0
    %s33 = sadd.s32 %s32, 1
    %s34 = scalar_select %p31, %s32, %s33
    %p37 = pneg %p31
    %p38 = scmp.eq.s32.totalorder %s8, 1
    %p39 = por %p37, %p38
    %p40 = scmp.ne.s32.totalorder %s32, %s35
    %p41 = scmp.eq.s32.totalorder %s8, 0
    %p42 = por %p40, %p41
    %p43 = scmp.ne.s32.totalorder %s32, %s35
    %p44 = scmp.eq.s32.totalorder %s13, 1
    %p45 = por %p43, %p44
    %p46 = scmp.ne.s32.totalorder %s35, %s36
    %p47 = scmp.eq.s32.totalorder %s13, 0
    %p48 = por %p46, %p47
    %p49 = scmp.ne.s32.totalorder %s35, %s36
    %p50 = scmp.eq.s32.totalorder %s14, 1
    %p51 = por %p49, %p50
    %p53 = scmp.ne.s32.totalorder %s36, %s52
    %p54 = scmp.eq.s32.totalorder %s14, 0
    %p55 = por %p53, %p54
    %s57 = sadd.s32 %s56, 1
    %p60 = scmp.eq.s32.totalorder %s8, 1
    %p61 = scmp.ne.s32.totalorder %s56, %s58
    %p62 = scmp.eq.s32.totalorder %s8, 0
    %p63 = por %p61, %p62
    %p64 = scmp.ne.s32.totalorder %s56, %s58
    %p65 = scmp.eq.s32.totalorder %s13, 1
    %p66 = por %p64, %p65
    %p67 = scmp.ne.s32.totalorder %s58, %s59
    %p68 = scmp.eq.s32.totalorder %s13, 0
    %p69 = por %p67, %p68
    %p70 = scmp.ne.s32.totalorder %s58, %s59
    %p71 = scmp.eq.s32.totalorder %s14, 1
    %p72 = por %p70, %p71
    %p74 = scmp.ne.s32.totalorder %s59, %s73
    %p75 = scmp.eq.s32.totalorder %s14, 0
    %p76 = por %p74, %p75
    %s77 = ssub.s32 %s15, %s27
    %s78 = ssub.s32 %s16, %s23
    %s79 = sor.u32 %s77, %s78
    %p80 = scmp.eq.s32.totalorder %s79, 0
    %s82 = sadd.s32 %s81, 1
    %s83 = scalar_select %p80, %s81, %s82
    %p86 = pneg %p80
    %p87 = scmp.eq.s32.totalorder %s8, 1
    %p88 = por %p86, %p87
    %p89 = scmp.ne.s32.totalorder %s81, %s84
    %p90 = scmp.eq.s32.totalorder %s8, 0
    %p91 = por %p89, %p90
    %p92 = scmp.ne.s32.totalorder %s81, %s84
    %p93 = scmp.eq.s32.totalorder %s13, 1
    %p94 = por %p92, %p93
    %p95 = scmp.ne.s32.totalorder %s84, %s85
    %p96 = scmp.eq.s32.totalorder %s13, 0
    %p97 = por %p95, %p96
    %p98 = scmp.ne.s32.totalorder %s84, %s85
    %p99 = scmp.eq.s32.totalorder %s14, 1
    %p100 = por %p98, %p99
    %p102 = scmp.ne.s32.totalorder %s85, %s101
    %p103 = scmp.eq.s32.totalorder %s14, 0
    %p104 = por %p102, %p103
    %p105 = scmp.le.s32.totalorder 1, %s8
    %p106 = scmp.lt.s32.totalorder %s8, 3
    %p107 = pnand %p105, %p106
    %p108 = pneg %p107
    // Predicated region
    $region9: #{reset_layer_forward.2} parent=5 // pred_check
      _
    $region10: #{reset_layer_forward.2} parent=5 // pred_check_branch
      %110 = sbr.rel (%p107) target = $region12
    $region11: #{reset_layer_forward.2} parent=5 // pred_region
      %s111 = ssub.s32 %s8, 1
      // Predicated region
      $region13: #{reset_layer_forward.2} parent=11 // pred_check
        %p112 = pneg %p69
      $region14: #{reset_layer_forward.2} parent=11 // pred_check_branch
        %114 = sbr.rel (%p112) target = $region16
      $region15: #{reset_layer_forward.2} parent=11 // pred_region
        _
      $region16: #{reset_layer_forward.2} parent=11 // pred_fallthru
        _
    $region12: #{reset_layer_forward.2} parent=5 // pred_fallthru
      _
    %p115 = scmp.lt.s32.totalorder %s8, 2
    // Predicated region
    $region17: #{reset_layer_forward.2} parent=5 // pred_check
      %p116 = pneg %p115
    $region18: #{reset_layer_forward.2} parent=5 // pred_check_branch
      %118 = sbr.rel (%p116) target = $region20
    $region19: #{reset_layer_forward.2} parent=5 // pred_region
      // Predicated region
      $region21: #{reset_layer_forward.2} parent=19 // pred_check
        %p119 = pneg %p42
      $region22: #{reset_layer_forward.2} parent=19 // pred_check_branch
        %121 = sbr.rel (%p119) target = $region24
      $region23: #{reset_layer_forward.2} parent=19 // pred_region
        %s122 = smul.u32 2, %s16
        %p123 = scmp.lt.s32.totalorder %s15, 1
        %s124 = scalar_select %p123, %s15, 1
        %p125 = scmp.lt.s32.totalorder %s122, 1
        %s126 = scalar_select %p125, %s122, 1
        %s127 = smul.addr %s124, 10
        %s128 = sadd.s32 %s126, %s127
        %s129 = smul.addr %s128, 8
        %s130 = scalar_lea.vmem %s0, %s129
        %s131 = smul.u32 2, %s16
      $region24: #{reset_layer_forward.2} parent=19 // pred_fallthru
        _
    $region20: #{reset_layer_forward.2} parent=5 // pred_fallthru
      _
    %p132 = scmp.le.s32.totalorder 1, %s8
    %p133 = scmp.lt.s32.totalorder %s8, 3
    %p134 = pnand %p132, %p133
    %p135 = pneg %p134
    // Predicated region
    $region25: #{reset_layer_forward.2} parent=5 // pred_check
      _
    $region26: #{reset_layer_forward.2} parent=5 // pred_check_branch
      %137 = sbr.rel (%p134) target = $region28
    $region27: #{reset_layer_forward.2} parent=5 // pred_region
      %s138 = ssub.s32 %s8, 1
      %s139 = smul.u32 2, %s18
      %p140 = scmp.lt.s32.totalorder %s17, 1
      %s141 = scalar_select %p140, %s17, 1
      %p142 = scmp.lt.s32.totalorder %s139, 1
      %s143 = scalar_select %p142, %s139, 1
      %s144 = smul.addr %s141, 10
      %s145 = sadd.s32 %s143, %s144
      %s146 = smul.addr %s145, 8
      %s147 = scalar_lea.vmem %s0, %s146
      %p148 = pneg %p48
      %p149 = pneg %p45
      %p150 = pneg %p69
      %p151 = pneg %p66
      %p152 = pneg %p97
      %p153 = pneg %p94
      %p154 = scmp.lt.s32.totalorder %s17, 1
      %s155 = scalar_select %p154, %s17, 1
      %p156 = scmp.lt.s32.totalorder %s18, 0
      %s157 = scalar_select %p156, %s18, 0
      %s158 = sadd.s32 %s157, %s155
      %s159 = smul.addr %s158, 8
      %s160 = scalar_lea.vmem %s2, %s159
      %s161 = smul.u32 2, %s18
      %p162 = scmp.lt.s32.totalorder %s17, 1
      %s163 = scalar_select %p162, %s17, 1
      %p164 = scmp.lt.s32.totalorder %s161, 1
      %s165 = scalar_select %p164, %s161, 1
      %s166 = smul.addr %s163, 10
      %s167 = sadd.s32 %s165, %s166
      %s168 = smul.addr %s167, 8
      %s169 = scalar_lea.vmem %s0, %s168
      %s170 = smul.u32 2, %s18
      %p171 = scmp.lt.s32.totalorder %s17, 1
      %s172 = scalar_select %p171, %s17, 1
      %p173 = scmp.lt.s32.totalorder %s18, 0
      %s174 = scalar_select %p173, %s18, 0
      %s175 = sadd.s32 %s174, %s172
      %s176 = smul.addr %s175, 8
      %s177 = scalar_lea.vmem %s2, %s176
      %v178 = vld [vmem:[%s1] sm:$0xff]
      %v179 = vld [vmem:[%s169] sm:$0xff]
      %v180 = vld [vmem:[%s169 + $0x8] sm:$0xff]
      %v181 = vld [vmem:[%s169 + $0x10] sm:$0xff]
      %v182 = vld [vmem:[%s169 + $0x18] sm:$0xff]
      %v183 = vld [vmem:[%s169 + $0x20] sm:$0xff]
      %v184 = vld [vmem:[%s169 + $0x28] sm:$0xff]
      %v185 = vld [vmem:[%s169 + $0x30] sm:$0xff]
      %v186 = vld [vmem:[%s169 + $0x38] sm:$0xff]
      %v187 = vld [vmem:[%s169 + $0x40] sm:$0xff]
      %v188 = vld [vmem:[%s169 + $0x48] sm:$0xff]
      %vm189 = vcmask 326656
      %v191 = vsel %vm189, %v178, 0
      %193 = vmatprep.subr.mxu0 0.0
      %194 = vmatpush1.msra.mxu0 0.0
      %195 = vmatprep.subr.mxu0 0.0
      %196 = vmatpush1.msra.mxu0 0.0
      %197 = vmatprep.subr.mxu0 0.0
      %198 = vmatpush1.msra.mxu0 0.0
      %199 = vmatprep.subr.mxu0 0.0
      %200 = vmatpush1.msra.mxu0 0.0
      %201 = vmatprep.subr.mxu0 0.0
      %202 = vmatpush1.msra.mxu0 0.0
      %203 = vmatprep.subr.mxu0 0.0
      %204 = vmatpush1.msra.mxu0 0.0
      %205 = vmatprep.subr.mxu0 0.0
      %206 = vmatpush1.msra.mxu0 0.0
      %207 = vmatprep.subr.mxu0 0.0
      %208 = vmatpush1.msra.mxu0 0.0
      %209 = vmatprep.subr.mxu0 0.0
      %210 = vmatpush1.msra.mxu0 0.0
      %211 = vmatprep.subr.mxu0 0.0
      %212 = vmatpush1.msra.mxu0 0.0
      %213 = vmatprep.subr.mxu0 0.0
      %214 = vmatpush1.msra.mxu0 0.0
      %215 = vmatprep.subr.mxu0 %v188
      %216 = vmatpush1.msra.mxu0 %v187
      %217 = vmatprep.subr.mxu0 %v186
      %218 = vmatpush1.msra.mxu0 %v185
      %219 = vmatprep.subr.mxu0 %v184
      %220 = vmatpush1.msra.mxu0 %v183
      %221 = vmatprep.subr.mxu0 %v182
      %222 = vmatpush1.msra.mxu0 %v181
      %223 = vmatprep.subr.mxu0 %v180
      %224 = vmatpush1.msra.mxu0 %v179
      %225 = vmatprep.subr.mxu0 0.0
      %226 = vmatpush2.msra.mxu0 0.0
      %227 = vmatprep.subr.mxu0 0.0
      %228 = vmatpush2.msra.mxu0 0.0
      %229 = vmatprep.subr.mxu0 0.0
      %230 = vmatpush2.msra.mxu0 0.0
      %231 = vmatprep.subr.mxu0 0.0
      %232 = vmatpush2.msra.mxu0 0.0
      %233 = vmatprep.subr.mxu0 0.0
      %234 = vmatpush2.msra.mxu0 0.0
      %235 = vmatprep.subr.mxu0 0.0
      %236 = vmatpush2.msra.mxu0 0.0
      %237 = vmatprep.subr.mxu0 0.0
      %238 = vmatpush2.msra.mxu0 0.0
      %239 = vmatprep.subr.mxu0 0.0
      %240 = vmatpush2.msra.mxu0 0.0
      %241 = vmatprep.subr.mxu0 0.0
      %242 = vmatpush2.msra.mxu0 0.0
      %243 = vmatprep.subr.mxu0 0.0
      %244 = vmatpush2.msra.mxu0 0.0
      %245 = vmatprep.subr.mxu0 0.0
      %246 = vmatpush2.msra.mxu0 0.0
      %247 = vmatprep.subr.mxu0 0.0
      %248 = vmatpush2.msra.mxu0 0.0
      %249 = vmatprep.subr.mxu0 0.0
      %250 = vmatpush2.msra.mxu0 0.0
      %251 = vmatprep.subr.mxu0 0.0
      %252 = vmatpush2.msra.mxu0 0.0
      %253 = vmatprep.subr.mxu0 0.0
      %254 = vmatpush2.msra.mxu0 0.0
      %255 = vmatprep.subr.mxu0 0.0
      %256 = vmatpush2.msra.mxu0 0.0
      %257 = vmatprep.mubr.f32.mxu0 0.0
      %258 = vmatmul.mubr.f32.gmra.mxu0 %v191
      %v259 = vpop.f32.mrf.mxu0
      %v260 = vadd.f32 0.0, %v259
      %v261 = vpop.f32.mrf.mxu0
      %v262 = vadd.f32 0.0, %v261
      %263 = vdwg.mxu0
      %v264 = vadd.f32 %v260, %v262
      %265 = vadd.xlane.f32.xlu0 %v264
      %v266 = vpop.xlane.xlu0 %265
      %vm267 = vcmask 7168
      %268 = vst.msk [vmem:[%s177] sm:$0xff] %vm267, %v266
      %v269 = vmul.f32 %v260, %v260
      %v270 = vmul.f32 %v262, %v262
      %v271 = vadd.f32 %v269, %v270
      %272 = vadd.xlane.f32.xlu0 %v271
      %v273 = vpop.xlane.xlu0 %272
      %vm274 = vcmask 15368
      %275 = vst.msk [vmem:[%s177] sm:$0xff] %vm274, %v273
      %p276 = scmp.lt.s32.totalorder %s17, 1
      %s277 = scalar_select %p276, %s17, 1
      %p278 = scmp.lt.s32.totalorder %s18, 0
      %s279 = scalar_select %p278, %s18, 0
      %s280 = sadd.s32 %s279, %s277
      %s281 = smul.addr %s280, 8
      %s282 = scalar_lea.vmem %s2, %s281
      // Predicated region
      $region29: #{reset_layer_forward.2} parent=27 // pred_check
        %p283 = pneg %p94
      $region30: #{reset_layer_forward.2} parent=27 // pred_check_branch
        %285 = sbr.rel (%p283) target = $region32
      $region31: #{reset_layer_forward.2} parent=27 // pred_region
        _
      $region32: #{reset_layer_forward.2} parent=27 // pred_fallthru
        _
    $region28: #{reset_layer_forward.2} parent=5 // pred_fallthru
      _
    %p286 = scmp.le.s32.totalorder 2, %s8
    // Predicated region
    $region33: #{reset_layer_forward.2} parent=5 // pred_check
      %p287 = pneg %p286
    $region34: #{reset_layer_forward.2} parent=5 // pred_check_branch
      %289 = sbr.rel (%p287) target = $region36
    $region35: #{reset_layer_forward.2} parent=5 // pred_region
      %s290 = ssub.s32 %s8, 2
      // Predicated region
      $region37: #{reset_layer_forward.2} parent=35 // pred_check
        %p291 = pneg %p100
      $region38: #{reset_layer_forward.2} parent=35 // pred_check_branch
        %293 = sbr.rel (%p291) target = $region40
      $region39: #{reset_layer_forward.2} parent=35 // pred_region
        %p294 = scmp.lt.s32.totalorder %s19, 1
        %s295 = scalar_select %p294, %s19, 1
        %p296 = scmp.lt.s32.totalorder %s20, 0
        %s297 = scalar_select %p296, %s20, 0
        %s298 = sadd.s32 %s297, %s295
        %s299 = smul.addr %s298, 8
        %s300 = scalar_lea.vmem %s2, %s299
      $region40: #{reset_layer_forward.2} parent=35 // pred_fallthru
        _
    $region36: #{reset_layer_forward.2} parent=5 // pred_fallthru
      _
  $region6: #{reset_layer_forward.2} parent=0 // loop_footer
    %s12 = sadd.s32 1, %s8
  $region7: #{reset_layer_forward.2} parent=0 // loop_footer_branch
    %7 = sbr.rel target = $region3
  $region8: #{reset_layer_forward.2} parent=0 // loop_exit
    _

// kernel: reset_layer_forward.3
$region0: #{reset_layer_forward.3}
  #allocation0 [shape = 'u32[]', space=smem, size = 0x4, offset = 0x4, fixed_abs, tag = 'smem constant byte address 0x4 - core index']
  #allocation1 [shape = 'u32[144,128]{1,0:T(1,128)}', space=vmem, size = 0x12000, scoped, tag = 'internal scratch']
  %s0 = inlined_call_operand.vmem [shape: f32[2,40,256], index: 0, kind: input, shape index: {}]
  %s1 = inlined_call_operand.vmem [shape: f32[8,40], index: 1, kind: input, shape index: {}]
  %s2 = inlined_call_operand.vmem [shape: f32[8,2], index: 2, kind: input, shape index: {}]
  %s3 = inlined_call_operand.vmem [shape: f32[2,8,256], index: 3, kind: output, shape index: {}]
  %s4 = sld [smem:[#allocation0]]
  $region45: #{reset_layer_forward.3} parent=0
    _
  %s6 = ssub.s32 1, %s4
  %s7 = scalar_select 0, %s6, %s4
  loop: start=0, step=1, limit=4
  $region2: #{reset_layer_forward.3} parent=0 // loop_pre_header
    _
  $region3: #{reset_layer_forward.3} parent=0 // loop_header
    %s9 = sphi 0, %s13
    %p10 = scmp.ge.s32.totalorder %s9, 4
    %s16 = sphi 0, %s28
    %s17 = sphi 0, %s24
    %s18 = sphi 0, %s16
    %s19 = sphi 0, %s17
    %s20 = sphi 0, %s18
    %s21 = sphi 0, %s19
    %s33 = sphi 0, %s35
    %s36 = sphi 0, %s33
    %s37 = sphi 0, %s36
    %s53 = sphi 0, %s37
    %s57 = sphi 0, %s57
    %s59 = sphi 0, %s57
    %s60 = sphi 0, %s59
    %s74 = sphi 0, %s60
    %s78 = sphi 0, %s78
    %s80 = sphi 0, %s78
    %s81 = sphi 0, %s80
    %s95 = sphi 0, %s81
    %s103 = sphi 0, %s105
    %s106 = sphi 0, %s103
    %s107 = sphi 0, %s106
    %s123 = sphi 0, %s107
  $region4: #{reset_layer_forward.3} parent=0 // loop_header_branch
    %12 = sbr.rel (%p10) target = $region8
  $region5: #{reset_layer_forward.3} parent=0 // loop_body
    %s14 = ssub.s32 %s9, 1
    %s15 = ssub.s32 %s9, 2
    %s22 = sadd.s32 1, %s17
    %p23 = scmp.ge.s32.totalorder %s22, 1
    %s24 = scalar_select %p23, 0, %s22
    %s25 = sadd.s32 1, %s16
    %s26 = scalar_select %p23, %s25, %s16
    %p27 = scmp.ge.s32.totalorder %s26, 2
    %s28 = scalar_select %p27, 0, %s26
    %s29 = ssub.s32 %s16, %s28
    %s30 = ssub.s32 %s17, %s24
    %s31 = sor.u32 %s29, %s30
    %p32 = scmp.eq.s32.totalorder %s31, 0
    %s34 = sadd.s32 %s33, 1
    %s35 = scalar_select %p32, %s33, %s34
    %p38 = pneg %p32
    %p39 = scmp.eq.s32.totalorder %s9, 1
    %p40 = por %p38, %p39
    %p41 = scmp.ne.s32.totalorder %s33, %s36
    %p42 = scmp.eq.s32.totalorder %s9, 0
    %p43 = por %p41, %p42
    %p44 = scmp.ne.s32.totalorder %s33, %s36
    %p45 = scmp.eq.s32.totalorder %s14, 1
    %p46 = por %p44, %p45
    %p47 = scmp.ne.s32.totalorder %s36, %s37
    %p48 = scmp.eq.s32.totalorder %s14, 0
    %p49 = por %p47, %p48
    %p50 = scmp.ne.s32.totalorder %s36, %s37
    %p51 = scmp.eq.s32.totalorder %s15, 1
    %p52 = por %p50, %p51
    %p54 = scmp.ne.s32.totalorder %s37, %s53
    %p55 = scmp.eq.s32.totalorder %s15, 0
    %p56 = por %p54, %p55
    %s58 = sadd.s32 %s57, 1
    %p61 = scmp.eq.s32.totalorder %s9, 1
    %p62 = scmp.ne.s32.totalorder %s57, %s59
    %p63 = scmp.eq.s32.totalorder %s9, 0
    %p64 = por %p62, %p63
    %p65 = scmp.ne.s32.totalorder %s57, %s59
    %p66 = scmp.eq.s32.totalorder %s14, 1
    %p67 = por %p65, %p66
    %p68 = scmp.ne.s32.totalorder %s59, %s60
    %p69 = scmp.eq.s32.totalorder %s14, 0
    %p70 = por %p68, %p69
    %p71 = scmp.ne.s32.totalorder %s59, %s60
    %p72 = scmp.eq.s32.totalorder %s15, 1
    %p73 = por %p71, %p72
    %p75 = scmp.ne.s32.totalorder %s60, %s74
    %p76 = scmp.eq.s32.totalorder %s15, 0
    %p77 = por %p75, %p76
    %s79 = sadd.s32 %s78, 1
    %p82 = scmp.eq.s32.totalorder %s9, 1
    %p83 = scmp.ne.s32.totalorder %s78, %s80
    %p84 = scmp.eq.s32.totalorder %s9, 0
    %p85 = por %p83, %p84
    %p86 = scmp.ne.s32.totalorder %s78, %s80
    %p87 = scmp.eq.s32.totalorder %s14, 1
    %p88 = por %p86, %p87
    %p89 = scmp.ne.s32.totalorder %s80, %s81
    %p90 = scmp.eq.s32.totalorder %s14, 0
    %p91 = por %p89, %p90
    %p92 = scmp.ne.s32.totalorder %s80, %s81
    %p93 = scmp.eq.s32.totalorder %s15, 1
    %p94 = por %p92, %p93
    %p96 = scmp.ne.s32.totalorder %s81, %s95
    %p97 = scmp.eq.s32.totalorder %s15, 0
    %p98 = por %p96, %p97
    %s99 = ssub.s32 %s16, %s28
    %s100 = ssub.s32 %s17, %s24
    %s101 = sor.u32 %s99, %s100
    %p102 = scmp.eq.s32.totalorder %s101, 0
    %s104 = sadd.s32 %s103, 1
    %s105 = scalar_select %p102, %s103, %s104
    %p108 = pneg %p102
    %p109 = scmp.eq.s32.totalorder %s9, 1
    %p110 = por %p108, %p109
    %p111 = scmp.ne.s32.totalorder %s103, %s106
    %p112 = scmp.eq.s32.totalorder %s9, 0
    %p113 = por %p111, %p112
    %p114 = scmp.ne.s32.totalorder %s103, %s106
    %p115 = scmp.eq.s32.totalorder %s14, 1
    %p116 = por %p114, %p115
    %p117 = scmp.ne.s32.totalorder %s106, %s107
    %p118 = scmp.eq.s32.totalorder %s14, 0
    %p119 = por %p117, %p118
    %p120 = scmp.ne.s32.totalorder %s106, %s107
    %p121 = scmp.eq.s32.totalorder %s15, 1
    %p122 = por %p120, %p121
    %p124 = scmp.ne.s32.totalorder %s107, %s123
    %p125 = scmp.eq.s32.totalorder %s15, 0
    %p126 = por %p124, %p125
    %p127 = scmp.le.s32.totalorder 1, %s9
    %p128 = scmp.lt.s32.totalorder %s9, 3
    %p129 = pnand %p127, %p128
    %p130 = pneg %p129
    // Predicated region
    $region9: #{reset_layer_forward.3} parent=5 // pred_check
      _
    $region10: #{reset_layer_forward.3} parent=5 // pred_check_branch
      %132 = sbr.rel (%p129) target = $region12
    $region11: #{reset_layer_forward.3} parent=5 // pred_region
      %s133 = ssub.s32 %s9, 1
      // Predicated region
      $region13: #{reset_layer_forward.3} parent=11 // pred_check
        %p134 = pneg %p70
      $region14: #{reset_layer_forward.3} parent=11 // pred_check_branch
        %136 = sbr.rel (%p134) target = $region16
      $region15: #{reset_layer_forward.3} parent=11 // pred_region
        _
      $region16: #{reset_layer_forward.3} parent=11 // pred_fallthru
        _
      // Predicated region
      $region17: #{reset_layer_forward.3} parent=11 // pred_check
        %p137 = pneg %p91
      $region18: #{reset_layer_forward.3} parent=11 // pred_check_branch
        %139 = sbr.rel (%p137) target = $region20
      $region19: #{reset_layer_forward.3} parent=11 // pred_region
        _
      $region20: #{reset_layer_forward.3} parent=11 // pred_fallthru
        _
    $region12: #{reset_layer_forward.3} parent=5 // pred_fallthru
      _
    %p140 = scmp.lt.s32.totalorder %s9, 2
    // Predicated region
    $region21: #{reset_layer_forward.3} parent=5 // pred_check
      %p141 = pneg %p140
    $region22: #{reset_layer_forward.3} parent=5 // pred_check_branch
      %143 = sbr.rel (%p141) target = $region24
    $region23: #{reset_layer_forward.3} parent=5 // pred_region
      // Predicated region
      $region25: #{reset_layer_forward.3} parent=23 // pred_check
        %p144 = pneg %p43
      $region26: #{reset_layer_forward.3} parent=23 // pred_check_branch
        %146 = sbr.rel (%p144) target = $region28
      $region27: #{reset_layer_forward.3} parent=23 // pred_region
        %s147 = smul.u32 2, %s17
        %p148 = scmp.lt.s32.totalorder %s16, 1
        %s149 = scalar_select %p148, %s16, 1
        %p150 = scmp.lt.s32.totalorder %s147, 1
        %s151 = scalar_select %p150, %s147, 1
        %s152 = smul.addr %s149, 10
        %s153 = sadd.s32 %s151, %s152
        %s154 = smul.addr %s153, 8
        %s155 = scalar_lea.vmem %s0, %s154
        %s156 = smul.u32 2, %s17
      $region28: #{reset_layer_forward.3} parent=23 // pred_fallthru
        _
    $region24: #{reset_layer_forward.3} parent=5 // pred_fallthru
      _
    %p157 = scmp.le.s32.totalorder 1, %s9
    %p158 = scmp.lt.s32.totalorder %s9, 3
    %p159 = pnand %p157, %p158
    %p160 = pneg %p159
    // Predicated region
    $region29: #{reset_layer_forward.3} parent=5 // pred_check
      _
    $region30: #{reset_layer_forward.3} parent=5 // pred_check_branch
      %162 = sbr.rel (%p159) target = $region32
    $region31: #{reset_layer_forward.3} parent=5 // pred_region
      %s163 = ssub.s32 %s9, 1
      %s164 = smul.u32 2, %s19
      %p165 = scmp.lt.s32.totalorder %s18, 1
      %s166 = scalar_select %p165, %s18, 1
      %p167 = scmp.lt.s32.totalorder %s164, 1
      %s168 = scalar_select %p167, %s164, 1
      %s169 = smul.addr %s166, 10
      %s170 = sadd.s32 %s168, %s169
      %s171 = smul.addr %s170, 8
      %s172 = scalar_lea.vmem %s0, %s171
      %p173 = pneg %p49
      %p174 = pneg %p46
      %p175 = pneg %p70
      %p176 = pneg %p67
      %p177 = pneg %p91
      %p178 = pneg %p88
      %p179 = pneg %p119
      %p180 = pneg %p116
      %s181 = smul.u32 2, %s19
      %p182 = scmp.lt.s32.totalorder %s18, 1
      %s183 = scalar_select %p182, %s18, 1
      %p184 = scmp.lt.s32.totalorder %s181, 1
      %s185 = scalar_select %p184, %s181, 1
      %s186 = smul.addr %s183, 2
      %s187 = sadd.s32 %s185, %s186
      %s188 = smul.addr %s187, 8
      %s189 = scalar_lea.vmem %s3, %s188
      %s190 = smul.u32 2, %s19
      %p191 = scmp.lt.s32.totalorder %s18, 1
      %s192 = scalar_select %p191, %s18, 1
      %p193 = scmp.lt.s32.totalorder %s190, 1
      %s194 = scalar_select %p193, %s190, 1
      %s195 = smul.addr %s192, 10
      %s196 = sadd.s32 %s194, %s195
      %s197 = smul.addr %s196, 8
      %s198 = scalar_lea.vmem %s0, %s197
      %s199 = smul.u32 2, %s19
      %s200 = smul.u32 2, %s19
      %p201 = scmp.lt.s32.totalorder %s18, 1
      %s202 = scalar_select %p201, %s18, 1
      %p203 = scmp.lt.s32.totalorder %s200, 1
      %s204 = scalar_select %p203, %s200, 1
      %s205 = smul.addr %s202, 2
      %s206 = sadd.s32 %s204, %s205
      %s207 = smul.addr %s206, 8
      %s208 = scalar_lea.vmem %s3, %s207
      %s209 = smul.u32 2, %s19
      %v210 = vld [vmem:[%s1] sm:$0xff]
      %v211 = vld [vmem:[%s198] sm:$0xff]
      %v212 = vld [vmem:[%s198 + $0x8] sm:$0xff]
      %v213 = vld [vmem:[%s198 + $0x10] sm:$0xff]
      %v214 = vld [vmem:[%s198 + $0x18] sm:$0xff]
      %v215 = vld [vmem:[%s198 + $0x20] sm:$0xff]
      %v216 = vld [vmem:[%s198 + $0x28] sm:$0xff]
      %v217 = vld [vmem:[%s198 + $0x30] sm:$0xff]
      %v218 = vld [vmem:[%s198 + $0x38] sm:$0xff]
      %v219 = vld [vmem:[%s198 + $0x40] sm:$0xff]
      %v220 = vld [vmem:[%s198 + $0x48] sm:$0xff]
      %vm221 = vcmask 326656
      %v223 = vsel %vm221, %v210, 0
      %225 = vmatprep.subr.mxu0 0.0
      %226 = vmatpush1.msra.mxu0 0.0
      %227 = vmatprep.subr.mxu0 0.0
      %228 = vmatpush1.msra.mxu0 0.0
      %229 = vmatprep.subr.mxu0 0.0
      %230 = vmatpush1.msra.mxu0 0.0
      %231 = vmatprep.subr.mxu0 0.0
      %232 = vmatpush1.msra.mxu0 0.0
      %233 = vmatprep.subr.mxu0 0.0
      %234 = vmatpush1.msra.mxu0 0.0
      %235 = vmatprep.subr.mxu0 0.0
      %236 = vmatpush1.msra.mxu0 0.0
      %237 = vmatprep.subr.mxu0 0.0
      %238 = vmatpush1.msra.mxu0 0.0
      %239 = vmatprep.subr.mxu0 0.0
      %240 = vmatpush1.msra.mxu0 0.0
      %241 = vmatprep.subr.mxu0 0.0
      %242 = vmatpush1.msra.mxu0 0.0
      %243 = vmatprep.subr.mxu0 0.0
      %244 = vmatpush1.msra.mxu0 0.0
      %245 = vmatprep.subr.mxu0 0.0
      %246 = vmatpush1.msra.mxu0 0.0
      %247 = vmatprep.subr.mxu0 %v220
      %248 = vmatpush1.msra.mxu0 %v219
      %249 = vmatprep.subr.mxu0 %v218
      %250 = vmatpush1.msra.mxu0 %v217
      %251 = vmatprep.subr.mxu0 %v216
      %252 = vmatpush1.msra.mxu0 %v215
      %253 = vmatprep.subr.mxu0 %v214
      %254 = vmatpush1.msra.mxu0 %v213
      %255 = vmatprep.subr.mxu0 %v212
      %256 = vmatpush1.msra.mxu0 %v211
      %257 = vmatprep.subr.mxu0 0.0
      %258 = vmatpush2.msra.mxu0 0.0
      %259 = vmatprep.subr.mxu0 0.0
      %260 = vmatpush2.msra.mxu0 0.0
      %261 = vmatprep.subr.mxu0 0.0
      %262 = vmatpush2.msra.mxu0 0.0
      %263 = vmatprep.subr.mxu0 0.0
      %264 = vmatpush2.msra.mxu0 0.0
      %265 = vmatprep.subr.mxu0 0.0
      %266 = vmatpush2.msra.mxu0 0.0
      %267 = vmatprep.subr.mxu0 0.0
      %268 = vmatpush2.msra.mxu0 0.0
      %269 = vmatprep.subr.mxu0 0.0
      %270 = vmatpush2.msra.mxu0 0.0
      %271 = vmatprep.subr.mxu0 0.0
      %272 = vmatpush2.msra.mxu0 0.0
      %273 = vmatprep.subr.mxu0 0.0
      %274 = vmatpush2.msra.mxu0 0.0
      %275 = vmatprep.subr.mxu0 0.0
      %276 = vmatpush2.msra.mxu0 0.0
      %277 = vmatprep.subr.mxu0 0.0
      %278 = vmatpush2.msra.mxu0 0.0
      %279 = vmatprep.subr.mxu0 0.0
      %280 = vmatpush2.msra.mxu0 0.0
      %281 = vmatprep.subr.mxu0 0.0
      %282 = vmatpush2.msra.mxu0 0.0
      %283 = vmatprep.subr.mxu0 0.0
      %284 = vmatpush2.msra.mxu0 0.0
      %285 = vmatprep.subr.mxu0 0.0
      %286 = vmatpush2.msra.mxu0 0.0
      %287 = vmatprep.subr.mxu0 0.0
      %288 = vmatpush2.msra.mxu0 0.0
      %289 = vmatprep.mubr.f32.mxu0 0.0
      %290 = vmatmul.mubr.f32.gmra.mxu0 %v223
      %v291 = vpop.f32.mrf.mxu0
      %v292 = vadd.f32 0.0, %v291
      %v293 = vpop.f32.mrf.mxu0
      %v294 = vadd.f32 0.0, %v293
      %295 = vdwg.mxu0
      %v296 = vld [vmem:[%s2] sm:$0xff]
      %298 = vset.pattern.permute.xlu0 0
      %299 = vperm.xlu0 %298, %v296
      %v300 = vpop.permute.xlu0 %299
      %v302 = vmul.f32 %v292, %v300
      %v303 = vmul.f32 %v294, %v300
      %304 = vset.pattern.permute.xlu0 1
      %305 = vperm.xlu0 %304, %v296
      %v306 = vpop.permute.xlu0 %305
      %v308 = vadd.f32 %v302, %v306
      %v309 = vadd.f32 %v303, %v306
      %310 = vst [vmem:[%s208] sm:$0xff] %v308
      %311 = vst [vmem:[%s208 + $0x8] sm:$0xff] %v309
      %s312 = smul.u32 2, %s19
      %p313 = scmp.lt.s32.totalorder %s18, 1
      %s314 = scalar_select %p313, %s18, 1
      %p315 = scmp.lt.s32.totalorder %s312, 1
      %s316 = scalar_select %p315, %s312, 1
      %s317 = smul.addr %s314, 2
      %s318 = sadd.s32 %s316, %s317
      %s319 = smul.addr %s318, 8
      %s320 = scalar_lea.vmem %s3, %s319
      // Predicated region
      $region33: #{reset_layer_forward.3} parent=31 // pred_check
        %p321 = pneg %p116
      $region34: #{reset_layer_forward.3} parent=31 // pred_check_branch
        %323 = sbr.rel (%p321) target = $region36
      $region35: #{reset_layer_forward.3} parent=31 // pred_region
        %s324 = smul.u32 2, %s19
      $region36: #{reset_layer_forward.3} parent=31 // pred_fallthru
        _
    $region32: #{reset_layer_forward.3} parent=5 // pred_fallthru
      _
    %p325 = scmp.le.s32.totalorder 2, %s9
    // Predicated region
    $region37: #{reset_layer_forward.3} parent=5 // pred_check
      %p326 = pneg %p325
    $region38: #{reset_layer_forward.3} parent=5 // pred_check_branch
      %328 = sbr.rel (%p326) target = $region40
    $region39: #{reset_layer_forward.3} parent=5 // pred_region
      %s329 = ssub.s32 %s9, 2
      // Predicated region
      $region41: #{reset_layer_forward.3} parent=39 // pred_check
        %p330 = pneg %p122
      $region42: #{reset_layer_forward.3} parent=39 // pred_check_branch
        %332 = sbr.rel (%p330) target = $region44
      $region43: #{reset_layer_forward.3} parent=39 // pred_region
        %s333 = smul.u32 2, %s21
        %p334 = scmp.lt.s32.totalorder %s20, 1
        %s335 = scalar_select %p334, %s20, 1
        %p336 = scmp.lt.s32.totalorder %s333, 1
        %s337 = scalar_select %p336, %s333, 1
        %s338 = smul.addr %s335, 2
        %s339 = sadd.s32 %s337, %s338
        %s340 = smul.addr %s339, 8
        %s341 = scalar_lea.vmem %s3, %s340
      $region44: #{reset_layer_forward.3} parent=39 // pred_fallthru
        _
    $region40: #{reset_layer_forward.3} parent=5 // pred_fallthru
      _
  $region6: #{reset_layer_forward.3} parent=0 // loop_footer
    %s13 = sadd.s32 1, %s9
  $region7: #{reset_layer_forward.3} parent=0 // loop_footer_branch
    %8 = sbr.rel target = $region3
  $region8: #{reset_layer_forward.3} parent=0 // loop_exit
    _

</llo_original>
